<compile_context>
chip_gen: v7x
topology: tpu7x:2x2x1
jax: 0.10.0
libtpu: 0.0.40
codegen_flags: <defaults>
</compile_context>

<pallas_src>
import functools

import jax
import jax.numpy as jnp
from jax import lax
from jax.experimental import pallas as pl
from jax.experimental.pallas import tpu as pltpu

CLAMP_MIN = 0.002
CLAMP_MAX = 0.2


def _center_pixel_conv_clamp_kernel(center_flat_idx, xc_ref, w_ref, b_ref, o_ref):
    # xc_ref: (N, C)  channels of the single in-bounds pixel, C on lanes
    # w_ref:  (1, C)  1x1-conv weight, lane-major
    # b_ref:  (1, 1)  bias scalar in SMEM
    # o_ref:  (N, OH*OW) lane-dense output
    b = b_ref[0, 0]

    # 24/25 output pixels see only zero padding -> clamp(bias).
    const = jnp.minimum(jnp.maximum(b, CLAMP_MIN), CLAMP_MAX)

    # Center pixel: per-batch channel contraction on VPU/XLU (no MXU for a
    # 1-wide RHS).
    prod = xc_ref[...] * w_ref[...]                       # (N, C) VPU multiply
    center = jnp.sum(prod, axis=1, keepdims=True) + b     # (N, 1) lane reduce
    center = jnp.minimum(jnp.maximum(center, CLAMP_MIN), CLAMP_MAX)

    # Scatter: column `center_flat_idx` gets the computed value, rest the const.
    col = lax.broadcasted_iota(jnp.int32, o_ref.shape, 1)
    o_ref[...] = jnp.where(col == center_flat_idx, center, const).astype(o_ref.dtype)


def conv1x1_stride_pad_clamp(x, weight, bias, *, stride=2, padding=3):
    """x: (N, C, H, W). weight: (1, C, 1, 1). bias: (1,).

    Equivalent to clamp_max(clamp_min(Conv2d(C, 1, 1, stride, padding)(x),
    CLAMP_MIN), CLAMP_MAX). Returns (N, 1, OH, OW).
    """
    N, C, H, W = x.shape
    OH = (H + 2 * padding - 1) // stride + 1
    OW = (W + 2 * padding - 1) // stride + 1

    # Trace-time geometry: which output positions see a real (non-padded) pixel.
    vh = [(oh, oh * stride - padding) for oh in range(OH)
          if 0 <= oh * stride - padding < H]
    vw = [(ow, ow * stride - padding) for ow in range(OW)
          if 0 <= ow * stride - padding < W]
    # This module's geometry (3x3 input, pad=3, stride=2) has exactly one
    # in-bounds sample per spatial axis.
    assert len(vh) == 1 and len(vw) == 1, (vh, vw)
    (oh_c, ih_c), (ow_c, iw_c) = vh[0], vw[0]
    center_flat_idx = oh_c * OW + ow_c

    xc = x[:, :, ih_c, iw_c]          # (N, C) — only pixel that matters
    wm = weight.reshape(1, C)         # (1, C) lane-major weight
    bm = bias.reshape(1, 1)           # (1, 1) SMEM scalar

    out = pl.pallas_call(
        functools.partial(_center_pixel_conv_clamp_kernel, center_flat_idx),
        out_shape=jax.ShapeDtypeStruct((N, OH * OW), x.dtype),
        in_specs=[
            pl.BlockSpec(memory_space=pltpu.MemorySpace.VMEM),
            pl.BlockSpec(memory_space=pltpu.MemorySpace.VMEM),
            pl.BlockSpec(memory_space=pltpu.MemorySpace.SMEM),
        ],
        out_specs=pl.BlockSpec(memory_space=pltpu.MemorySpace.VMEM),
    )(xc, wm, bm)

    return out.reshape(N, 1, OH, OW)  # back to NCHW


if __name__ == "__main__":
    key = jax.random.PRNGKey(0)
    kx, kw, kb = jax.random.split(key, 3)

    # Matches the PyTorch module: x1 = randn(2, 16, 3, 3),
    # Conv2d(16, 1, 1, stride=2, padding=3).
    x1 = jax.random.normal(kx, (2, 16, 3, 3), dtype=jnp.float32)
    weight = jax.random.normal(kw, (1, 16, 1, 1), dtype=jnp.float32) * 0.1
    bias = jax.random.normal(kb, (1,), dtype=jnp.float32) * 0.1

    conv_fn = jax.jit(conv1x1_stride_pad_clamp)
    out = conv_fn(x1, weight, bias)
    jax.block_until_ready(out)

    # Reference check in plain JAX.
    ref = lax.conv_general_dilated(
        x1, weight, window_strides=(2, 2), padding=((3, 3), (3, 3)),
        dimension_numbers=("NCHW", "OIHW", "NCHW"),
    ) + bias.reshape(1, 1, 1, 1)
    ref = jnp.clip(ref, CLAMP_MIN, CLAMP_MAX)

    assert out.shape == (2, 1, 5, 5), out.shape
    assert jnp.allclose(out, ref, atol=1e-5, rtol=1e-5), float(jnp.max(jnp.abs(out - ref)))
    print("KERNEL_OK")
</pallas_src>

<mosaic_0001>
module attributes {stable_mosaic.version = 11 : i64} {
  func.func @_center_pixel_conv_clamp_kernel(%arg0: memref<2x16xf32, #tpu.memory_space<vmem>>, %arg1: memref<1x16xf32, #tpu.memory_space<vmem>>, %arg2: memref<1x1xf32, #tpu.memory_space<smem>>, %arg3: memref<2x25xf32, #tpu.memory_space<vmem>>) attributes {dimension_semantics = [], scalar_prefetch = 0 : i64, scratch_operands = 0 : i64, tpu.core_type = #tpu.core_type<tc>} {
    %c0 = arith.constant 0 : index
    %c0_0 = arith.constant 0 : index
    %0 = memref.load %arg2[%c0, %c0_0] : memref<1x1xf32, #tpu.memory_space<smem>>
    %cst = arith.constant 2.000000e-03 : f32
    %1 = arith.maximumf %0, %cst : f32
    %cst_1 = arith.constant 2.000000e-01 : f32
    %2 = arith.minimumf %1, %cst_1 : f32
    %c0_2 = arith.constant 0 : index
    %c0_3 = arith.constant 0 : index
    %3 = vector.load %arg0[%c0_2, %c0_3] : memref<2x16xf32, #tpu.memory_space<vmem>>, vector<2x16xf32>
    %c0_4 = arith.constant 0 : index
    %c0_5 = arith.constant 0 : index
    %4 = vector.load %arg1[%c0_4, %c0_5] : memref<1x16xf32, #tpu.memory_space<vmem>>, vector<1x16xf32>
    %5 = vector.broadcast %4 : vector<1x16xf32> to vector<2x16xf32>
    %6 = arith.mulf %3, %5 : vector<2x16xf32>
    %cst_6 = arith.constant dense<0.000000e+00> : vector<2xf32>
    %7 = vector.multi_reduction <add>, %6, %cst_6 [1] : vector<2x16xf32> to vector<2xf32>
    %8 = vector.shape_cast %7 : vector<2xf32> to vector<2x1xf32>
    %9 = vector.broadcast %0 : f32 to vector<2x1xf32>
    %10 = arith.addf %8, %9 : vector<2x1xf32>
    %cst_7 = arith.constant 2.000000e-03 : f32
    %11 = vector.broadcast %cst_7 : f32 to vector<2x1xf32>
    %12 = arith.maximumf %10, %11 : vector<2x1xf32>
    %cst_8 = arith.constant 2.000000e-01 : f32
    %13 = vector.broadcast %cst_8 : f32 to vector<2x1xf32>
    %14 = arith.minimumf %12, %13 : vector<2x1xf32>
    %15 = tpu.iota {dimensions = array<i32: 1>} : vector<2x25xi32>
    %c12_i32 = arith.constant 12 : i32
    %16 = vector.broadcast %c12_i32 : i32 to vector<2x25xi32>
    %17 = arith.cmpi eq, %15, %16 : vector<2x25xi32>
    %18 = vector.shape_cast %14 : vector<2x1xf32> to vector<2x1xf32>
    %19 = vector.broadcast %18 : vector<2x1xf32> to vector<2x25xf32>
    %20 = vector.broadcast %2 : f32 to vector<2x25xf32>
    %21 = arith.select %17, %19, %20 : vector<2x25xi1>, vector<2x25xf32>
    %c0_9 = arith.constant 0 : index
    %c0_10 = arith.constant 0 : index
    %22 = vector.load %arg3[%c0_9, %c0_10] : memref<2x25xf32, #tpu.memory_space<vmem>>, vector<2x25xf32>
    tpu.vector_store %arg3[%c0_9, %c0_10], %21 {strides = array<i32>} : memref<2x25xf32, #tpu.memory_space<vmem>>, vector<2x25xf32>,
    return
  }
}

</mosaic_0001>

<llo_original>
// kernel: conv1x1_stride_pad_clamp.1
$region0: #{conv1x1_stride_pad_clamp.1}
  #allocation0 [shape = 'u32[]', space=smem, size = 0x4, offset = 0x4, fixed_abs, tag = 'smem constant byte address 0x4 - core index']
  #allocation1 [shape = 'u32[144,128]{1,0:T(1,128)}', space=vmem, size = 0x12000, scoped, tag = 'internal scratch']
  #allocation2 [shape = 'f32[1,1]{1,0:T(1,128)S(6)}', space=smem, size = 0x200, scoped, tag = 'scoped memory for conv1x1_stride_pad_clamp.1']
  %s0 = inlined_call_operand.vmem [shape: f32[2,16], index: 0, kind: input, shape index: {}]
  %s1 = inlined_call_operand.vmem [shape: f32[1,16], index: 1, kind: input, shape index: {}]
  %s2 = inlined_call_operand.<no memory space> [shape: f32[1,1], index: 2, kind: input, shape index: {}]
  %s3 = inlined_call_operand.vmem [shape: f32[2,25], index: 3, kind: output, shape index: {}]
  %s4 = sld [smem:[#allocation0]]
  $region22: #{conv1x1_stride_pad_clamp.1} parent=0
    _
  %s6 = ssub.s32 1, %s4
  %s7 = scalar_select 0, %s6, %s4
  %8 = sst [smem:[#allocation2]] %s2
  // Predicated region
  $region2: #{conv1x1_stride_pad_clamp.1} parent=0 // pred_check
    _
  $region3: #{conv1x1_stride_pad_clamp.1} parent=0 // pred_check_branch
    %10 = sbr.rel (0) target = $region5
  $region4: #{conv1x1_stride_pad_clamp.1} parent=0 // pred_region
    _
  $region5: #{conv1x1_stride_pad_clamp.1} parent=0 // pred_fallthru
    _
  // Predicated region
  $region6: #{conv1x1_stride_pad_clamp.1} parent=0 // pred_check
    _
  $region7: #{conv1x1_stride_pad_clamp.1} parent=0 // pred_check_branch
    %12 = sbr.rel (0) target = $region9
  $region8: #{conv1x1_stride_pad_clamp.1} parent=0 // pred_region
    _
  $region9: #{conv1x1_stride_pad_clamp.1} parent=0 // pred_fallthru
    _
  // Predicated region
  $region10: #{conv1x1_stride_pad_clamp.1} parent=0 // pred_check
    _
  $region11: #{conv1x1_stride_pad_clamp.1} parent=0 // pred_check_branch
    %14 = sbr.rel (0) target = $region13
  $region12: #{conv1x1_stride_pad_clamp.1} parent=0 // pred_region
    _
  $region13: #{conv1x1_stride_pad_clamp.1} parent=0 // pred_fallthru
    _
  %s15 = sld [smem:[#allocation2]]
  %s16 = smax.f32 %s15, 0.002
  %s17 = smin.f32 %s16, 0.2
  %v18 = vld [vmem:[%s0] sm:$0x3]
  %v19 = vld [vmem:[%s1] sm:$0x1]
  %v21 = vlaneseq
  %v22 = vshrl.u32 %v21, 7
  %v23 = vsub.s32 0, %v22
  %v24 = vrot.slane %v19, %v23
  %v26 = vmul.f32 %v18, %v24
  %vm27 = vcmask 123904
  %v28 = vsel %vm27, %v26, 0.0
  %29 = vadd.xlane.f32.xlu0 %v28
  %v30 = vpop.xlane.xlu0 %29
  %v31 = vstv %s15
  %v32 = vadd.f32 %v30, %v31
  %v33 = vmax.f32 %v32, 0.002
  %v34 = vmin.f32 %v33, 0.2
  %v35 = vlaneseq
  %v36 = vand.u32 %v35, 127
  %vm37 = vcmp.eq.s32.totalorder %v36, 12
  %v38 = vstv %s17
  %v39 = vsel %vm37, %v34, %v38
  %vm40 = vcmask 197632
  %41 = vst.msk [vmem:[%s3] sm:$0x3] %vm40, %v39
  // Predicated region
  $region14: #{conv1x1_stride_pad_clamp.1} parent=0 // pred_check
    _
  $region15: #{conv1x1_stride_pad_clamp.1} parent=0 // pred_check_branch
    %43 = sbr.rel (0) target = $region17
  $region16: #{conv1x1_stride_pad_clamp.1} parent=0 // pred_region
    _
  $region17: #{conv1x1_stride_pad_clamp.1} parent=0 // pred_fallthru
    _
  // Predicated region
  $region18: #{conv1x1_stride_pad_clamp.1} parent=0 // pred_check
    _
  $region19: #{conv1x1_stride_pad_clamp.1} parent=0 // pred_check_branch
    %45 = sbr.rel (0) target = $region21
  $region20: #{conv1x1_stride_pad_clamp.1} parent=0 // pred_region
    _
  $region21: #{conv1x1_stride_pad_clamp.1} parent=0 // pred_fallthru
    _

</llo_original>
